<compile_context>
chip_gen: v5e
topology: v5e:2x2
jax: 0.10.0
libtpu: 0.0.40
codegen_flags: <defaults>
</compile_context>

<pallas_src>
import numpy as np
import jax
import jax.numpy as jnp
from jax import lax
from jax.experimental import pallas as pl
from jax.experimental.pallas import tpu as pltpu


def _haar_kernel(cf_ref, x_ref, o_ref):
    bn, _, H2, W2 = o_ref.shape
    W = x_ref.shape[-1] // 2

    # x row m = (image n, row-pair h2) = [x[n, 2h2, :] | x[n, 2h2+1, :]].
    x = x_ref[...].astype(jnp.float32)        # (bn*H2, 2W)
    cf = cf_ref[...]                          # (W, 2*W2) = 0.5*[col_sum | col_diff]

    # Row stage (VPU): pair sums / diffs of vertically adjacent rows.
    xs = x[:, :W] + x[:, W:]                  # (bn*H2, W)
    xd = x[:, :W] - x[:, W:]                  # (bn*H2, W)

    # Column stage (MXU): fused column sum/diff matrix, 0.5 folded in.
    ys = jnp.dot(xs, cf, preferred_element_type=jnp.float32)   # [k0 | k1]
    yd = jnp.dot(xd, cf, preferred_element_type=jnp.float32)   # [k2 | k3]

    # Wavelet ordering matches the PyTorch 2x2 weights:
    #   k0: (a+b+c+d)/2  k1: (a-b+c-d)/2  k2: (a+b-c-d)/2  k3: (a-b-c+d)/2
    k0 = ys[:, :W2].reshape(bn, H2, W2)
    k1 = ys[:, W2:].reshape(bn, H2, W2)
    k2 = yd[:, :W2].reshape(bn, H2, W2)
    k3 = yd[:, W2:].reshape(bn, H2, W2)
    o_ref[...] = jnp.stack([k0, k1, k2, k3], axis=1).astype(o_ref.dtype)


def _column_haar_matrix(W, W2):
    """Fused (W, 2*W2) column pair-sum | pair-diff matrix, scaled by 0.5."""
    cf = np.zeros((W, 2 * W2), np.float32)
    j = np.arange(W2)
    cf[2 * j, j] = 0.5
    cf[2 * j + 1, j] = 0.5
    cf[2 * j, W2 + j] = 0.5
    cf[2 * j + 1, W2 + j] = -0.5
    return jnp.asarray(cf)


def _pick_block_n(N, H2, block_n=None):
    if block_n is not None:
        assert N % block_n == 0, 'block_n must divide B*C'
        return block_n
    # ~2048 flattened row-pairs per grid step: a few hundred KB of HBM traffic
    # per step (amortizes per-step overhead), while double-buffered blocks stay
    # well inside scoped VMEM on every generation (incl. v7x's 64 MiB per TC).
    cap = max(1, 2048 // max(1, H2))
    best = None
    for bn in range(1, min(N, cap) + 1):
        # (bn*H2) % 8 keeps the input block's sublane dim (8,128)-legal.
        if N % bn == 0 and (bn * H2) % 8 == 0:
            best = bn
    # bn == N always satisfies the (8,128) rule (block rows == full array dim).
    return best if best is not None else N


def haar_multiplex_forward(x, order_by_wavelet=False, block_n=None):
    """Pallas equivalent of haar_multiplex_layer.forward(x, rev=False)."""
    B, C, H, W = x.shape
    assert H % 2 == 0 and W % 2 == 0, 'Uneven input dimensions'
    H2, W2 = H // 2, W // 2
    N = B * C
    dtype = x.dtype

    cf = _column_haar_matrix(W, W2)

    # Free reshape: row m = (b, c, h2) holds [x[b,c,2h2,:] | x[b,c,2h2+1,:]].
    x2d = x.reshape(N * H2, 2 * W)

    bn = _pick_block_n(N, H2, block_n)
    bm = bn * H2
    grid = (N // bn,)

    out4 = pl.pallas_call(
        _haar_kernel,
        out_shape=jax.ShapeDtypeStruct((N, 4, H2, W2), dtype),
        grid_spec=pltpu.PrefetchScalarGridSpec(
            num_scalar_prefetch=0,
            grid=grid,
            in_specs=[
                pl.BlockSpec((W, 2 * W2), lambda i: (0, 0)),    # resident weight
                pl.BlockSpec((bm, 2 * W), lambda i: (i, 0)),    # image row-pairs
            ],
            out_specs=pl.BlockSpec((bn, 4, H2, W2), lambda i: (i, 0, 0, 0)),
        ),
        compiler_params=pltpu.CompilerParams(
            dimension_semantics=("parallel",),
            vmem_limit_bytes=32 * 1024 * 1024),
    )(cf, x2d)

    if order_by_wavelet:
        # Wavelet-major channel order (matches the module's `perm`), done with
        # a cheap axis swap instead of a gather.
        out = out4.reshape(B, C, 4, H2, W2).transpose(0, 2, 1, 3, 4)
        return out.reshape(B, 4 * C, H2, W2)
    # Grouped-conv channel order out[:, 4*c + k]: pure reshape, no transpose.
    return out4.reshape(B, 4 * C, H2, W2)


def haar_reference(x, order_by_wavelet=False):
    """Pure-JAX reference: grouped conv with the exact PyTorch haar_weights."""
    B, C, H, W = x.shape
    w = np.ones((4, 1, 2, 2), np.float32)
    w[1, 0, 0, 1] = -1.; w[1, 0, 1, 1] = -1.
    w[2, 0, 1, 0] = -1.; w[2, 0, 1, 1] = -1.
    w[3, 0, 1, 0] = -1.; w[3, 0, 0, 1] = -1.
    w *= 0.5
    w = jnp.asarray(np.concatenate([w] * C, axis=0), x.dtype)   # (4C, 1, 2, 2)
    out = lax.conv_general_dilated(
        x, w, window_strides=(2, 2), padding='VALID',
        dimension_numbers=('NCHW', 'OIHW', 'NCHW'),
        feature_group_count=C)
    if order_by_wavelet:
        perm = np.array([i + 4 * j for i in range(4) for j in range(C)])
        out = out[:, perm]
    return out


if __name__ == "__main__":
    key = jax.random.PRNGKey(0)
    x = jax.random.normal(key, (2, 4, 16, 16), dtype=jnp.float32)  # NCHW

    out = jax.block_until_ready(haar_multiplex_forward(x))          # rev=False
    ref = haar_reference(x)
    assert out.shape == (2, 16, 8, 8), out.shape
    assert jnp.allclose(out, ref, atol=1e-5, rtol=1e-5), \
        float(jnp.max(jnp.abs(out - ref)))

    out_p = jax.block_until_ready(haar_multiplex_forward(x, order_by_wavelet=True))
    ref_p = haar_reference(x, order_by_wavelet=True)
    assert jnp.allclose(out_p, ref_p, atol=1e-5, rtol=1e-5), \
        float(jnp.max(jnp.abs(out_p - ref_p)))

    print("KERNEL_OK")
</pallas_src>

<mosaic_0001>
module attributes {stable_mosaic.version = 11 : i64} {
  func.func @_haar_kernel(%arg0: i32, %arg1: memref<16x16xf32, #tpu.memory_space<vmem>>, %arg2: memref<64x32xf32, #tpu.memory_space<vmem>>, %arg3: memref<8x4x8x8xf32, #tpu.memory_space<vmem>>) attributes {dimension_semantics = [#tpu.dimension_semantics<parallel>], iteration_bounds = array<i64: 1>, scalar_prefetch = 0 : i64, scratch_operands = 0 : i64, tpu.core_type = #tpu.core_type<tc>, window_params = [{pipeline_mode = #tpu.pipeline_mode<synchronous>, transform_indices = @transform_0, window_bounds = array<i64: 16, 16>}, {transform_indices = @transform_1, window_bounds = array<i64: 64, 32>}, {transform_indices = @transform_2, window_bounds = array<i64: 8, 4, 8, 8>}]} {
    %c0 = arith.constant 0 : index
    %c0_0 = arith.constant 0 : index
    %0 = vector.load %arg2[%c0, %c0_0] : memref<64x32xf32, #tpu.memory_space<vmem>>, vector<64x32xf32>
    %c0_1 = arith.constant 0 : index
    %c0_2 = arith.constant 0 : index
    %1 = vector.load %arg1[%c0_1, %c0_2] : memref<16x16xf32, #tpu.memory_space<vmem>>, vector<16x16xf32>
    %2 = vector.extract_strided_slice %0 {offsets = [0, 0], sizes = [64, 16], strides = [1, 1]} : vector<64x32xf32> to vector<64x16xf32>
    %3 = vector.extract_strided_slice %0 {offsets = [0, 16], sizes = [64, 16], strides = [1, 1]} : vector<64x32xf32> to vector<64x16xf32>
    %4 = arith.addf %2, %3 : vector<64x16xf32>
    %5 = vector.extract_strided_slice %0 {offsets = [0, 0], sizes = [64, 16], strides = [1, 1]} : vector<64x32xf32> to vector<64x16xf32>
    %6 = vector.extract_strided_slice %0 {offsets = [0, 16], sizes = [64, 16], strides = [1, 1]} : vector<64x32xf32> to vector<64x16xf32>
    %7 = arith.subf %5, %6 : vector<64x16xf32>
    %cst = arith.constant dense<0.000000e+00> : vector<64x16xf32>
    %8 = tpu.matmul %4, %1, %cst {dimension_numbers = #tpu.dot_dimension_numbers<[1], [0], [0], [1], [0, 0, 1, 1], [], []>} : vector<64x16xf32>, vector<16x16xf32>, vector<64x16xf32> -> vector<64x16xf32>
    %cst_3 = arith.constant dense<0.000000e+00> : vector<64x16xf32>
    %9 = tpu.matmul %7, %1, %cst_3 {dimension_numbers = #tpu.dot_dimension_numbers<[1], [0], [0], [1], [0, 0, 1, 1], [], []>} : vector<64x16xf32>, vector<16x16xf32>, vector<64x16xf32> -> vector<64x16xf32>
    %10 = vector.extract_strided_slice %8 {offsets = [0, 0], sizes = [64, 8], strides = [1, 1]} : vector<64x16xf32> to vector<64x8xf32>
    %11 = vector.shape_cast %10 : vector<64x8xf32> to vector<8x8x8xf32>
    %12 = vector.extract_strided_slice %8 {offsets = [0, 8], sizes = [64, 8], strides = [1, 1]} : vector<64x16xf32> to vector<64x8xf32>
    %13 = vector.shape_cast %12 : vector<64x8xf32> to vector<8x8x8xf32>
    %14 = vector.extract_strided_slice %9 {offsets = [0, 0], sizes = [64, 8], strides = [1, 1]} : vector<64x16xf32> to vector<64x8xf32>
    %15 = vector.shape_cast %14 : vector<64x8xf32> to vector<8x8x8xf32>
    %16 = vector.extract_strided_slice %9 {offsets = [0, 8], sizes = [64, 8], strides = [1, 1]} : vector<64x16xf32> to vector<64x8xf32>
    %17 = vector.shape_cast %16 : vector<64x8xf32> to vector<8x8x8xf32>
    %18 = vector.shape_cast %11 : vector<8x8x8xf32> to vector<8x1x8x8xf32>
    %19 = vector.shape_cast %13 : vector<8x8x8xf32> to vector<8x1x8x8xf32>
    %20 = vector.shape_cast %15 : vector<8x8x8xf32> to vector<8x1x8x8xf32>
    %21 = vector.shape_cast %17 : vector<8x8x8xf32> to vector<8x1x8x8xf32>
    %22 = tpu.concatenate %18, %19, %20, %21 in 1 : vector<8x1x8x8xf32>, vector<8x1x8x8xf32>, vector<8x1x8x8xf32>, vector<8x1x8x8xf32> -> vector<8x4x8x8xf32>
    %c0_4 = arith.constant 0 : index
    %c0_5 = arith.constant 0 : index
    %c0_6 = arith.constant 0 : index
    %c0_7 = arith.constant 0 : index
    %23 = vector.load %arg3[%c0_4, %c0_5, %c0_6, %c0_7] : memref<8x4x8x8xf32, #tpu.memory_space<vmem>>, vector<8x4x8x8xf32>
    tpu.vector_store %arg3[%c0_4, %c0_5, %c0_6, %c0_7], %22 {strides = array<i32>} : memref<8x4x8x8xf32, #tpu.memory_space<vmem>>, vector<8x4x8x8xf32>,
    return
  }
  func.func @transform_0(%arg0: i32) -> (i32, i32) {
    %c0_i32 = arith.constant 0 : i32
    %c0_i32_0 = arith.constant 0 : i32
    %c0_i32_1 = arith.constant 0 : i32
    return %c0_i32, %c0_i32_0 : i32, i32
  }
  func.func @transform_1(%arg0: i32) -> (i32, i32) {
    %c0_i32 = arith.constant 0 : i32
    %c0_i32_0 = arith.constant 0 : i32
    return %arg0, %c0_i32 : i32, i32
  }
  func.func @transform_2(%arg0: i32) -> (i32, i32, i32, i32) {
    %c0_i32 = arith.constant 0 : i32
    %c0_i32_0 = arith.constant 0 : i32
    %c0_i32_1 = arith.constant 0 : i32
    %c0_i32_2 = arith.constant 0 : i32
    return %arg0, %c0_i32, %c0_i32_0, %c0_i32_1 : i32, i32, i32, i32
  }
}

</mosaic_0001>

<llo_original>
// kernel: tpu_custom_call.1
$region0: #{tpu_custom_call.1}
  #allocation0 [shape = 'u32[]', space=smem, size = 0x4, offset = 0x4, fixed_abs, tag = 'smem constant byte address 0x4 - core index']
  #allocation1 [shape = 'u32[72,128]{1,0:T(1,128)}', space=vmem, size = 0x9000, scoped, tag = 'internal scratch']
  %s0 = inlined_call_operand.vmem [shape: f32[16,16], index: 0, kind: input, shape index: {}]
  %s1 = inlined_call_operand.vmem [shape: f32[64,32], index: 1, kind: input, shape index: {}]
  %s2 = inlined_call_operand.hbm [shape: f32[8,4,8,8], index: 2, kind: output, shape index: {}]
  %s3 = sld [smem:[#allocation0]]
  $region18: #{tpu_custom_call.1} parent=0
    _
  %s5 = ssub.s32 1, %s3
  %s6 = scalar_select 0, %s5, %s3
  $region1: #{tpu_custom_call.1} parent=0
    #allocation2 [shape = 'u8[131072]{0}', space=vmem, size = 0x20000, scoped, tag = 'output window, operand 0, single buffered']
    #allocation3 [shape = 's32[1]{0}', space=sflag, size = 0x4, scoped, tag = 'scoped memory for tpu_custom_call.1']
    %7 = vsyncpa [#allocation3], 0
    // Predicated region
    $region2: #{tpu_custom_call.1} parent=1 // pred_check
      _
    $region3: #{tpu_custom_call.1} parent=1 // pred_check_branch
      %9 = sbr.rel (0) target = $region5
    $region4: #{tpu_custom_call.1} parent=1 // pred_region
      _
    $region5: #{tpu_custom_call.1} parent=1 // pred_fallthru
      _
    // Predicated region
    $region6: #{tpu_custom_call.1} parent=1 // pred_check
      _
    $region7: #{tpu_custom_call.1} parent=1 // pred_check_branch
      %11 = sbr.rel (0) target = $region9
    $region8: #{tpu_custom_call.1} parent=1 // pred_region
      _
    $region9: #{tpu_custom_call.1} parent=1 // pred_fallthru
      _
    %v12 = vld [vmem:[%s1] sm:$0xff]
    %v13 = vld [vmem:[%s1 + $0x8] sm:$0xff]
    %v14 = vld [vmem:[%s1 + $0x10] sm:$0xff]
    %v15 = vld [vmem:[%s1 + $0x18] sm:$0xff]
    %v16 = vld [vmem:[%s1 + $0x20] sm:$0xff]
    %v17 = vld [vmem:[%s1 + $0x28] sm:$0xff]
    %v18 = vld [vmem:[%s1 + $0x30] sm:$0xff]
    %v19 = vld [vmem:[%s1 + $0x38] sm:$0xff]
    %v20 = vld [vmem:[%s0] sm:$0xff]
    %v21 = vld [vmem:[%s0 + $0x8] sm:$0xff]
    %30 = vrot.lane.b32.xlu0 %v12, 112
    %v31 = vpop.permute.xlu0 %30
    %32 = vrot.lane.b32.xlu0 %v13, 112
    %v33 = vpop.permute.xlu0 %32
    %34 = vrot.lane.b32.xlu0 %v14, 112
    %v35 = vpop.permute.xlu0 %34
    %36 = vrot.lane.b32.xlu0 %v15, 112
    %v37 = vpop.permute.xlu0 %36
    %38 = vrot.lane.b32.xlu0 %v16, 112
    %v39 = vpop.permute.xlu0 %38
    %40 = vrot.lane.b32.xlu0 %v17, 112
    %v41 = vpop.permute.xlu0 %40
    %42 = vrot.lane.b32.xlu0 %v18, 112
    %v43 = vpop.permute.xlu0 %42
    %44 = vrot.lane.b32.xlu0 %v19, 112
    %v45 = vpop.permute.xlu0 %44
    %v54 = vadd.f32 %v12, %v31
    %v55 = vadd.f32 %v13, %v33
    %v56 = vadd.f32 %v14, %v35
    %v57 = vadd.f32 %v15, %v37
    %v58 = vadd.f32 %v16, %v39
    %v59 = vadd.f32 %v17, %v41
    %v60 = vadd.f32 %v18, %v43
    %v61 = vadd.f32 %v19, %v45
    %v62 = vsub.f32 %v12, %v31
    %v63 = vsub.f32 %v13, %v33
    %v64 = vsub.f32 %v14, %v35
    %v65 = vsub.f32 %v15, %v37
    %v66 = vsub.f32 %v16, %v39
    %v67 = vsub.f32 %v17, %v41
    %v68 = vsub.f32 %v18, %v43
    %v69 = vsub.f32 %v19, %v45
    %vm70 = vcmask 130048
    %v72 = vsel %vm70, %v54, 0
    %v75 = vsel %vm70, %v55, 0
    %v78 = vsel %vm70, %v56, 0
    %v81 = vsel %vm70, %v57, 0
    %v84 = vsel %vm70, %v58, 0
    %v87 = vsel %vm70, %v59, 0
    %v90 = vsel %vm70, %v60, 0
    %v93 = vsel %vm70, %v61, 0
    %95 = vmatpush.msra.mxu0 0.0
    %96 = vmatpush.msra.mxu0 0.0
    %97 = vmatpush.msra.mxu0 0.0
    %98 = vmatpush.msra.mxu0 0.0
    %99 = vmatpush.msra.mxu0 0.0
    %100 = vmatpush.msra.mxu0 0.0
    %101 = vmatpush.msra.mxu0 0.0
    %102 = vmatpush.msra.mxu0 0.0
    %103 = vmatpush.msra.mxu0 0.0
    %104 = vmatpush.msra.mxu0 0.0
    %105 = vmatpush.msra.mxu0 0.0
    %106 = vmatpush.msra.mxu0 0.0
    %107 = vmatpush.msra.mxu0 0.0
    %108 = vmatpush.msra.mxu0 0.0
    %109 = vmatpush.msra.mxu0 %v21
    %110 = vmatpush.msra.mxu0 %v20
    %111 = vmatmul.f32.gmra.mxu0 %v72
    %v112 = vpop.f32.mrf.mxu0
    %v113 = vadd.f32 0.0, %v112
    %114 = vmatmul.f32.gmra.mxu0 %v75
    %v115 = vpop.f32.mrf.mxu0
    %v116 = vadd.f32 0.0, %v115
    %117 = vmatmul.f32.gmra.mxu0 %v78
    %v118 = vpop.f32.mrf.mxu0
    %v119 = vadd.f32 0.0, %v118
    %120 = vmatmul.f32.gmra.mxu0 %v81
    %v121 = vpop.f32.mrf.mxu0
    %v122 = vadd.f32 0.0, %v121
    %123 = vmatmul.f32.gmra.mxu0 %v84
    %v124 = vpop.f32.mrf.mxu0
    %v125 = vadd.f32 0.0, %v124
    %126 = vmatmul.f32.gmra.mxu0 %v87
    %v127 = vpop.f32.mrf.mxu0
    %v128 = vadd.f32 0.0, %v127
    %129 = vmatmul.f32.gmra.mxu0 %v90
    %v130 = vpop.f32.mrf.mxu0
    %v131 = vadd.f32 0.0, %v130
    %132 = vmatmul.f32.gmra.mxu0 %v93
    %v133 = vpop.f32.mrf.mxu0
    %v134 = vadd.f32 0.0, %v133
    %135 = vdwg.mxu0
    %v137 = vsel %vm70, %v62, 0
    %v140 = vsel %vm70, %v63, 0
    %v143 = vsel %vm70, %v64, 0
    %v146 = vsel %vm70, %v65, 0
    %v149 = vsel %vm70, %v66, 0
    %v152 = vsel %vm70, %v67, 0
    %v155 = vsel %vm70, %v68, 0
    %v158 = vsel %vm70, %v69, 0
    %160 = vmatpush.msra.mxu0 0.0
    %161 = vmatpush.msra.mxu0 0.0
    %162 = vmatpush.msra.mxu0 0.0
    %163 = vmatpush.msra.mxu0 0.0
    %164 = vmatpush.msra.mxu0 0.0
    %165 = vmatpush.msra.mxu0 0.0
    %166 = vmatpush.msra.mxu0 0.0
    %167 = vmatpush.msra.mxu0 0.0
    %168 = vmatpush.msra.mxu0 0.0
    %169 = vmatpush.msra.mxu0 0.0
    %170 = vmatpush.msra.mxu0 0.0
    %171 = vmatpush.msra.mxu0 0.0
    %172 = vmatpush.msra.mxu0 0.0
    %173 = vmatpush.msra.mxu0 0.0
    %174 = vmatpush.msra.mxu0 %v21
    %175 = vmatpush.msra.mxu0 %v20
    %176 = vmatmul.f32.gmra.mxu0 %v137
    %v177 = vpop.f32.mrf.mxu0
    %v178 = vadd.f32 0.0, %v177
    %179 = vmatmul.f32.gmra.mxu0 %v140
    %v180 = vpop.f32.mrf.mxu0
    %v181 = vadd.f32 0.0, %v180
    %182 = vmatmul.f32.gmra.mxu0 %v143
    %v183 = vpop.f32.mrf.mxu0
    %v184 = vadd.f32 0.0, %v183
    %185 = vmatmul.f32.gmra.mxu0 %v146
    %v186 = vpop.f32.mrf.mxu0
    %v187 = vadd.f32 0.0, %v186
    %188 = vmatmul.f32.gmra.mxu0 %v149
    %v189 = vpop.f32.mrf.mxu0
    %v190 = vadd.f32 0.0, %v189
    %191 = vmatmul.f32.gmra.mxu0 %v152
    %v192 = vpop.f32.mrf.mxu0
    %v193 = vadd.f32 0.0, %v192
    %194 = vmatmul.f32.gmra.mxu0 %v155
    %v195 = vpop.f32.mrf.mxu0
    %v196 = vadd.f32 0.0, %v195
    %197 = vmatmul.f32.gmra.mxu0 %v158
    %v198 = vpop.f32.mrf.mxu0
    %v199 = vadd.f32 0.0, %v198
    %200 = vdwg.mxu0
    %209 = vrot.lane.b32.xlu0 %v113, 120
    %v210 = vpop.permute.xlu0 %209
    %211 = vrot.lane.b32.xlu0 %v116, 120
    %v212 = vpop.permute.xlu0 %211
    %213 = vrot.lane.b32.xlu0 %v119, 120
    %v214 = vpop.permute.xlu0 %213
    %215 = vrot.lane.b32.xlu0 %v122, 120
    %v216 = vpop.permute.xlu0 %215
    %217 = vrot.lane.b32.xlu0 %v125, 120
    %v218 = vpop.permute.xlu0 %217
    %219 = vrot.lane.b32.xlu0 %v128, 120
    %v220 = vpop.permute.xlu0 %219
    %221 = vrot.lane.b32.xlu0 %v131, 120
    %v222 = vpop.permute.xlu0 %221
    %223 = vrot.lane.b32.xlu0 %v134, 120
    %v224 = vpop.permute.xlu0 %223
    %241 = vrot.lane.b32.xlu0 %v178, 120
    %v242 = vpop.permute.xlu0 %241
    %243 = vrot.lane.b32.xlu0 %v181, 120
    %v244 = vpop.permute.xlu0 %243
    %245 = vrot.lane.b32.xlu0 %v184, 120
    %v246 = vpop.permute.xlu0 %245
    %247 = vrot.lane.b32.xlu0 %v187, 120
    %v248 = vpop.permute.xlu0 %247
    %249 = vrot.lane.b32.xlu0 %v190, 120
    %v250 = vpop.permute.xlu0 %249
    %251 = vrot.lane.b32.xlu0 %v193, 120
    %v252 = vpop.permute.xlu0 %251
    %253 = vrot.lane.b32.xlu0 %v196, 120
    %v254 = vpop.permute.xlu0 %253
    %255 = vrot.lane.b32.xlu0 %v199, 120
    %v256 = vpop.permute.xlu0 %255
    %vm265 = vcmask 64512
    %266 = vst.msk [vmem:[#allocation2] sm:$0xff] %vm265, %v113
    %267 = vst.msk [vmem:[#allocation2 + $0x8] sm:$0xff] %vm265, %v210
    %268 = vst.msk [vmem:[#allocation2 + $0x10] sm:$0xff] %vm265, %v178
    %269 = vst.msk [vmem:[#allocation2 + $0x18] sm:$0xff] %vm265, %v242
    %270 = vst.msk [vmem:[#allocation2 + $0x20] sm:$0xff] %vm265, %v116
    %271 = vst.msk [vmem:[#allocation2 + $0x28] sm:$0xff] %vm265, %v212
    %272 = vst.msk [vmem:[#allocation2 + $0x30] sm:$0xff] %vm265, %v181
    %273 = vst.msk [vmem:[#allocation2 + $0x38] sm:$0xff] %vm265, %v244
    %274 = vst.msk [vmem:[#allocation2 + $0x40] sm:$0xff] %vm265, %v119
    %275 = vst.msk [vmem:[#allocation2 + $0x48] sm:$0xff] %vm265, %v214
    %276 = vst.msk [vmem:[#allocation2 + $0x50] sm:$0xff] %vm265, %v184
    %277 = vst.msk [vmem:[#allocation2 + $0x58] sm:$0xff] %vm265, %v246
    %278 = vst.msk [vmem:[#allocation2 + $0x60] sm:$0xff] %vm265, %v122
    %279 = vst.msk [vmem:[#allocation2 + $0x68] sm:$0xff] %vm265, %v216
    %280 = vst.msk [vmem:[#allocation2 + $0x70] sm:$0xff] %vm265, %v187
    %281 = vst.msk [vmem:[#allocation2 + $0x78] sm:$0xff] %vm265, %v248
    %282 = vst.msk [vmem:[#allocation2 + $0x80] sm:$0xff] %vm265, %v125
    %283 = vst.msk [vmem:[#allocation2 + $0x88] sm:$0xff] %vm265, %v218
    %284 = vst.msk [vmem:[#allocation2 + $0x90] sm:$0xff] %vm265, %v190
    %285 = vst.msk [vmem:[#allocation2 + $0x98] sm:$0xff] %vm265, %v250
    %286 = vst.msk [vmem:[#allocation2 + $0xa0] sm:$0xff] %vm265, %v128
    %287 = vst.msk [vmem:[#allocation2 + $0xa8] sm:$0xff] %vm265, %v220
    %288 = vst.msk [vmem:[#allocation2 + $0xb0] sm:$0xff] %vm265, %v193
    %289 = vst.msk [vmem:[#allocation2 + $0xb8] sm:$0xff] %vm265, %v252
    %290 = vst.msk [vmem:[#allocation2 + $0xc0] sm:$0xff] %vm265, %v131
    %291 = vst.msk [vmem:[#allocation2 + $0xc8] sm:$0xff] %vm265, %v222
    %292 = vst.msk [vmem:[#allocation2 + $0xd0] sm:$0xff] %vm265, %v196
    %293 = vst.msk [vmem:[#allocation2 + $0xd8] sm:$0xff] %vm265, %v254
    %294 = vst.msk [vmem:[#allocation2 + $0xe0] sm:$0xff] %vm265, %v134
    %295 = vst.msk [vmem:[#allocation2 + $0xe8] sm:$0xff] %vm265, %v224
    %296 = vst.msk [vmem:[#allocation2 + $0xf0] sm:$0xff] %vm265, %v199
    %297 = vst.msk [vmem:[#allocation2 + $0xf8] sm:$0xff] %vm265, %v256
    // Predicated region
    $region10: #{tpu_custom_call.1} parent=1 // pred_check
      _
    $region11: #{tpu_custom_call.1} parent=1 // pred_check_branch
      %299 = sbr.rel (0) target = $region13
    $region12: #{tpu_custom_call.1} parent=1 // pred_region
      %301 = vsyncadd [#allocation3], 0
      %s302 = sshll.u32 [#allocation2], 4
      %s303 = int_to_ptr.vmem [resolvable:$true] %s302
      %s304 = sshll.u32 %s2, 4
      %s305 = int_to_ptr.hbm [resolvable:$true] %s304
      %310 = dma.vmem_to_hbm [thread:$0]  %s303, 4096, %s305, [#allocation3], 128, 128, 8
    $region13: #{tpu_custom_call.1} parent=1 // pred_fallthru
      _
    // Predicated region
    $region14: #{tpu_custom_call.1} parent=1 // pred_check
      _
    $region15: #{tpu_custom_call.1} parent=1 // pred_check_branch
      %312 = sbr.rel (0) target = $region17
    $region16: #{tpu_custom_call.1} parent=1 // pred_region
      %314 = dma.done [#allocation3], 4096
    $region17: #{tpu_custom_call.1} parent=1 // pred_fallthru
      _
    %315 = vsyncpa [#allocation3], 1

</llo_original>
